<compile_context>
chip_gen: v5e
topology: v5e:2x2
jax: 0.10.0
libtpu: 0.0.40
codegen_flags: <defaults>
</compile_context>

<pallas_src>
import functools

import jax
import jax.numpy as jnp
from jax.experimental import pallas as pl
from jax.experimental.pallas import tpu as pltpu

_LANE = 128
_BF16_SUBLANE = 16  # bf16 packed-sublane tile: keep batch tiles 16-multiples


def _round_up(x, m):
    return ((x + m - 1) // m) * m


def _vmem_cap_bytes():
    """Per-TensorCore VMEM capacity (64 MiB on v7x, 128 MiB on v5e/v6e)."""
    try:
        cap = getattr(pltpu.get_tpu_info(), "vmem_capacity_bytes", None)
        if cap:
            return int(cap)
    except Exception:
        pass
    return 64 << 20  # conservative fallback (v7x)


def _default_batch_tile(b, *, small_features=True):
    """Batch tile: 16-multiples; >=2 grid steps at small batch (v7x megacore);
    up to 2048-row tiles at large batch when feature dims are small (HBM-bound,
    amortizes the ~0.35 us/grid-step overhead)."""
    cap = 2048 if small_features else 512
    if b <= 16:
        return 16
    if b < 256:
        return min(cap, _round_up((b + 1) // 2, _BF16_SUBLANE))   # >= 2 steps
    return min(cap, _round_up((b + 3) // 4, _BF16_SUBLANE))       # >= 4 steps


def _mlp_kernel(x_ref, w1_ref, b1_ref, w2_ref, b2_ref, o_ref, *, n_cls):
    """Fused fc1 -> ReLU -> dropout(eval: identity) -> fc2 -> ReLU.

    Matmuls run on the MXU in the compute dtype (bf16 default) with f32
    accumulation; bias + ReLU epilogues stay f32; only the first `n_cls`
    output columns are stored.
    """
    x = x_ref[...]                                             # (tb, Dp)
    h = jnp.dot(x, w1_ref[...], preferred_element_type=jnp.float32)
    h = jnp.maximum(h + b1_ref[...], 0.0)                      # f32 epilogue (fc1)
    # dropout(p=0.5): identity in eval mode.
    # TODO(synk): training-mode dropout would need pltpu.prng_seed /
    # prng_random_bits masking + 1/(1-p) scaling; not part of this forward.
    h = h.astype(w2_ref.dtype)                                  # back to MXU dtype
    o = jnp.dot(h, w2_ref[...], preferred_element_type=jnp.float32)
    o = jnp.maximum(o + b2_ref[...], 0.0)                       # f32 epilogue (fc2)
    o_ref[...] = o[:, :n_cls].astype(o_ref.dtype)               # narrow, real columns only


@functools.partial(jax.jit, static_argnames=("n_cls", "batch_tile"))
def _forward(x, w1p, b1p, w2p, b2p, *, n_cls, batch_tile=None):
    """Jitted forward on pre-padded / pre-cast parameters."""
    B, d_in = x.shape
    d_pad, h_pad = w1p.shape
    c_pad = w2p.shape[1]
    cd = w1p.dtype
    csize = cd.itemsize

    small_features = max(d_pad, h_pad, c_pad) <= 256
    tb = batch_tile or _default_batch_tile(B, small_features=small_features)
    tb = _round_up(int(tb), _BF16_SUBLANE)
    b_pad = _round_up(max(B, tb), tb)

    # Pad x only when required (exact: padded columns hit zero weight rows).
    if d_in == d_pad and B == b_pad:
        xp = x.astype(cd)
    else:
        xp = jnp.zeros((b_pad, d_pad), cd).at[:B, :d_in].set(x.astype(cd))

    # ---- VMEM budget / buffering policy ------------------------------------
    cap = _vmem_cap_bytes()
    weight_bytes = (d_pad * h_pad + h_pad * c_pad) * csize
    # Weight blocks have a constant index -> one buffer suffices; only switch
    # when double-buffered weights would pressure the per-chip VMEM budget.
    single_buffer_weights = (2 * weight_bytes > cap // 3)
    w_buf = 1 if single_buffer_weights else 2

    vmem_need = (2 * tb * d_pad * csize                   # x tiles (double-buffered)
                 + w_buf * weight_bytes                   # resident weights
                 + 2 * (h_pad + c_pad) * 4                # biases
                 + 2 * tb * n_cls * 4                     # output tiles
                 + 2 * tb * max(h_pad, c_pad) * 4)        # f32 intermediates
    vmem_limit = int(min(max(vmem_need + (4 << 20), 16 << 20), cap))

    cost = pl.CostEstimate(
        flops=2 * b_pad * (d_pad * h_pad + h_pad * c_pad),
        transcendentals=0,
        bytes_accessed=int(xp.size * csize + w1p.size * csize + w2p.size * csize
                           + b1p.size * 4 + b2p.size * 4 + b_pad * n_cls * 4),
    )

    vmem = pltpu.MemorySpace.VMEM
    w_kwargs = {"memory_space": vmem}
    if single_buffer_weights:
        w_kwargs["pipeline_mode"] = pl.Buffered(1)

    out = pl.pallas_call(
        functools.partial(_mlp_kernel, n_cls=n_cls),
        out_shape=jax.ShapeDtypeStruct((b_pad, n_cls), jnp.float32),
        grid_spec=pltpu.PrefetchScalarGridSpec(
            num_scalar_prefetch=0,
            grid=(b_pad // tb,),
            in_specs=[
                pl.BlockSpec((tb, d_pad), lambda i: (i, 0), memory_space=vmem),
                pl.BlockSpec((d_pad, h_pad), lambda i: (0, 0), **w_kwargs),
                pl.BlockSpec((1, h_pad), lambda i: (0, 0), memory_space=vmem),
                pl.BlockSpec((h_pad, c_pad), lambda i: (0, 0), **w_kwargs),
                pl.BlockSpec((1, c_pad), lambda i: (0, 0), memory_space=vmem),
            ],
            # Legal narrow store: last dim equals the full array dim (n_cls).
            out_specs=pl.BlockSpec((tb, n_cls), lambda i: (i, 0),
                                   memory_space=vmem),
        ),
        compiler_params=pltpu.CompilerParams(
            dimension_semantics=("parallel",),
            vmem_limit_bytes=vmem_limit,
        ),
        cost_estimate=cost,
    )(xp, w1p, b1p, w2p, b2p)

    return out[:B] if b_pad != B else out


class RegularizedNNPallas:
    """Eval-mode RegularizedNN forward as a fused Pallas TPU kernel.

    Weights/biases are padded to 128-lane multiples and cast to the compute
    dtype ONCE at construction (cached), so the per-call path is a single
    jitted pad+pallas_call.  Accepts (N,) or (1, N) biases and ragged batches.
    """

    def __init__(self, w1, b1, w2, b2, *, compute_dtype=jnp.bfloat16,
                 batch_tile=None):
        d_in, num = w1.shape
        num2, n_cls = w2.shape
        assert num == num2, "fc1 output dim must match fc2 input dim"
        self.n_cls = int(n_cls)
        self.batch_tile = batch_tile
        cd = jnp.dtype(compute_dtype)

        d_pad = _round_up(d_in, _LANE)
        h_pad = _round_up(num, _LANE)
        c_pad = _round_up(n_cls, _LANE)

        # Zero padding is exact: padded x columns hit zero w1 rows, padded
        # hidden columns are ReLU(0)=0 and hit zero w2 rows, and only the real
        # n_cls output columns are ever written.
        self.w1p = jnp.zeros((d_pad, h_pad), cd).at[:d_in, :num].set(w1.astype(cd))
        self.w2p = jnp.zeros((h_pad, c_pad), cd).at[:num, :n_cls].set(w2.astype(cd))
        self.b1p = jnp.zeros((1, h_pad), jnp.float32).at[:, :num].set(
            jnp.reshape(b1, (1, num)).astype(jnp.float32))
        self.b2p = jnp.zeros((1, c_pad), jnp.float32).at[:, :n_cls].set(
            jnp.reshape(b2, (1, n_cls)).astype(jnp.float32))

    def __call__(self, x):
        return _forward(x, self.w1p, self.b1p, self.w2p, self.b2p,
                        n_cls=self.n_cls, batch_tile=self.batch_tile)


def regularized_nn_forward(x, w1, b1, w2, b2, *, compute_dtype=jnp.bfloat16,
                           batch_tile=None):
    """One-off convenience wrapper (prefer RegularizedNNPallas for repeated calls)."""
    return RegularizedNNPallas(w1, b1, w2, b2, compute_dtype=compute_dtype,
                               batch_tile=batch_tile)(x)


def _reference(x, w1, b1, w2, b2):
    h = jnp.maximum(x @ w1 + jnp.reshape(b1, (1, -1)), 0.0)
    return jnp.maximum(h @ w2 + jnp.reshape(b2, (1, -1)), 0.0)


if __name__ == "__main__":
    # Small shapes consistent with the module: input_size=32, num=32 (hidden),
    # num_classes=4, batch=8.
    batch, input_size, num, num_classes = 8, 32, 32, 4

    key = jax.random.PRNGKey(0)
    kx, kw1, kb1, kw2, kb2, kx2 = jax.random.split(key, 6)

    x = jax.random.normal(kx, (batch, input_size), dtype=jnp.float32)
    # Pre-transposed (in, out) weight layout; biases in raw PyTorch (N,) shape.
    w1 = jax.random.normal(kw1, (input_size, num), dtype=jnp.float32) * 0.1
    b1 = jax.random.normal(kb1, (num,), dtype=jnp.float32) * 0.1
    w2 = jax.random.normal(kw2, (num, num_classes), dtype=jnp.float32) * 0.1
    b2 = jax.random.normal(kb2, (num_classes,), dtype=jnp.float32) * 0.1

    ref = _reference(x, w1, b1, w2, b2)

    # Exactness check with f32 compute (validates padding / fusion / narrow store).
    model_f32 = RegularizedNNPallas(w1, b1, w2, b2, compute_dtype=jnp.float32)
    out_f32 = jax.block_until_ready(model_f32(x))
    assert out_f32.shape == (batch, num_classes)
    assert jnp.allclose(out_f32, ref, atol=1e-5, rtol=1e-5), "f32 mismatch vs reference"

    # Default fast path: bf16 MXU matmuls with f32 accumulation.
    model_bf16 = RegularizedNNPallas(w1, b1, w2, b2)
    out_bf16 = jax.block_until_ready(model_bf16(x))
    assert out_bf16.shape == (batch, num_classes)
    assert jnp.allclose(out_bf16, ref, atol=5e-2, rtol=5e-2), "bf16 mismatch vs reference"

    # Larger batch exercising >=2 grid steps (v7x megacore / pipelined path).
    x2 = jax.random.normal(kx2, (64, input_size), dtype=jnp.float32)
    ref2 = _reference(x2, w1, b1, w2, b2)
    out2 = jax.block_until_ready(model_f32(x2))
    assert out2.shape == (64, num_classes)
    assert jnp.allclose(out2, ref2, atol=1e-5, rtol=1e-5), "multi-tile mismatch vs reference"

    print("KERNEL_OK")
</pallas_src>

<mosaic_0001>
module attributes {stable_mosaic.version = 11 : i64} {
  func.func @_mlp_kernel(%arg0: i32, %arg1: memref<16x128xf32, #tpu.memory_space<vmem>>, %arg2: memref<128x128xf32, #tpu.memory_space<vmem>>, %arg3: memref<1x128xf32, #tpu.memory_space<vmem>>, %arg4: memref<128x128xf32, #tpu.memory_space<vmem>>, %arg5: memref<1x128xf32, #tpu.memory_space<vmem>>, %arg6: memref<16x4xf32, #tpu.memory_space<vmem>>) attributes {dimension_semantics = [#tpu.dimension_semantics<parallel>], iteration_bounds = array<i64: 1>, scalar_prefetch = 0 : i64, scratch_operands = 0 : i64, tpu.core_type = #tpu.core_type<tc>, window_params = [{transform_indices = @transform_0, window_bounds = array<i64: 16, 128>}, {pipeline_mode = #tpu.pipeline_mode<synchronous>, transform_indices = @transform_1, window_bounds = array<i64: 128, 128>}, {pipeline_mode = #tpu.pipeline_mode<synchronous>, transform_indices = @transform_2, window_bounds = array<i64: 1, 128>}, {pipeline_mode = #tpu.pipeline_mode<synchronous>, transform_indices = @transform_3, window_bounds = array<i64: 128, 128>}, {pipeline_mode = #tpu.pipeline_mode<synchronous>, transform_indices = @transform_4, window_bounds = array<i64: 1, 128>}, {transform_indices = @transform_5, window_bounds = array<i64: 16, 4>}]} {
    %c0 = arith.constant 0 : index
    %c0_0 = arith.constant 0 : index
    %0 = vector.load %arg1[%c0, %c0_0] : memref<16x128xf32, #tpu.memory_space<vmem>>, vector<16x128xf32>
    %c0_1 = arith.constant 0 : index
    %c0_2 = arith.constant 0 : index
    %1 = vector.load %arg2[%c0_1, %c0_2] : memref<128x128xf32, #tpu.memory_space<vmem>>, vector<128x128xf32>
    %cst = arith.constant dense<0.000000e+00> : vector<16x128xf32>
    %2 = tpu.matmul %0, %1, %cst {dimension_numbers = #tpu.dot_dimension_numbers<[1], [0], [0], [1], [0, 0, 1, 1], [], []>} : vector<16x128xf32>, vector<128x128xf32>, vector<16x128xf32> -> vector<16x128xf32>
    %c0_3 = arith.constant 0 : index
    %c0_4 = arith.constant 0 : index
    %3 = vector.load %arg3[%c0_3, %c0_4] : memref<1x128xf32, #tpu.memory_space<vmem>>, vector<1x128xf32>
    %4 = vector.broadcast %3 : vector<1x128xf32> to vector<16x128xf32>
    %5 = arith.addf %2, %4 : vector<16x128xf32>
    %cst_5 = arith.constant 0.000000e+00 : f32
    %6 = vector.broadcast %cst_5 : f32 to vector<16x128xf32>
    %7 = arith.maximumf %5, %6 : vector<16x128xf32>
    %c0_6 = arith.constant 0 : index
    %c0_7 = arith.constant 0 : index
    %8 = vector.load %arg4[%c0_6, %c0_7] : memref<128x128xf32, #tpu.memory_space<vmem>>, vector<128x128xf32>
    %cst_8 = arith.constant dense<0.000000e+00> : vector<16x128xf32>
    %9 = tpu.matmul %7, %8, %cst_8 {dimension_numbers = #tpu.dot_dimension_numbers<[1], [0], [0], [1], [0, 0, 1, 1], [], []>} : vector<16x128xf32>, vector<128x128xf32>, vector<16x128xf32> -> vector<16x128xf32>
    %c0_9 = arith.constant 0 : index
    %c0_10 = arith.constant 0 : index
    %10 = vector.load %arg5[%c0_9, %c0_10] : memref<1x128xf32, #tpu.memory_space<vmem>>, vector<1x128xf32>
    %11 = vector.broadcast %10 : vector<1x128xf32> to vector<16x128xf32>
    %12 = arith.addf %9, %11 : vector<16x128xf32>
    %cst_11 = arith.constant 0.000000e+00 : f32
    %13 = vector.broadcast %cst_11 : f32 to vector<16x128xf32>
    %14 = arith.maximumf %12, %13 : vector<16x128xf32>
    %15 = vector.extract_strided_slice %14 {offsets = [0, 0], sizes = [16, 4], strides = [1, 1]} : vector<16x128xf32> to vector<16x4xf32>
    %c0_12 = arith.constant 0 : index
    %c0_13 = arith.constant 0 : index
    %16 = vector.load %arg6[%c0_12, %c0_13] : memref<16x4xf32, #tpu.memory_space<vmem>>, vector<16x4xf32>
    tpu.vector_store %arg6[%c0_12, %c0_13], %15 {strides = array<i32>} : memref<16x4xf32, #tpu.memory_space<vmem>>, vector<16x4xf32>,
    return
  }
  func.func @transform_0(%arg0: i32) -> (i32, i32) {
    %c0_i32 = arith.constant 0 : i32
    %c0_i32_0 = arith.constant 0 : i32
    return %arg0, %c0_i32 : i32, i32
  }
  func.func @transform_1(%arg0: i32) -> (i32, i32) {
    %c0_i32 = arith.constant 0 : i32
    %c0_i32_0 = arith.constant 0 : i32
    %c0_i32_1 = arith.constant 0 : i32
    return %c0_i32, %c0_i32_0 : i32, i32
  }
  func.func @transform_2(%arg0: i32) -> (i32, i32) {
    %c0_i32 = arith.constant 0 : i32
    %c0_i32_0 = arith.constant 0 : i32
    %c0_i32_1 = arith.constant 0 : i32
    return %c0_i32, %c0_i32_0 : i32, i32
  }
  func.func @transform_3(%arg0: i32) -> (i32, i32) {
    %c0_i32 = arith.constant 0 : i32
    %c0_i32_0 = arith.constant 0 : i32
    %c0_i32_1 = arith.constant 0 : i32
    return %c0_i32, %c0_i32_0 : i32, i32
  }
  func.func @transform_4(%arg0: i32) -> (i32, i32) {
    %c0_i32 = arith.constant 0 : i32
    %c0_i32_0 = arith.constant 0 : i32
    %c0_i32_1 = arith.constant 0 : i32
    return %c0_i32, %c0_i32_0 : i32, i32
  }
  func.func @transform_5(%arg0: i32) -> (i32, i32) {
    %c0_i32 = arith.constant 0 : i32
    %c0_i32_0 = arith.constant 0 : i32
    return %arg0, %c0_i32 : i32, i32
  }
}

</mosaic_0001>

<llo_original>
// kernel: _forward.1
$region0: #{_forward.1}
  #allocation0 [shape = 'u32[]', space=smem, size = 0x4, offset = 0x4, fixed_abs, tag = 'smem constant byte address 0x4 - core index']
  #allocation1 [shape = 'u32[72,128]{1,0:T(1,128)}', space=vmem, size = 0x9000, scoped, tag = 'internal scratch']
  %s0 = inlined_call_operand.vmem [shape: f32[16,128], index: 0, kind: input, shape index: {}]
  %s1 = inlined_call_operand.hbm [shape: f32[128,128], index: 1, kind: input, shape index: {}]
  %s2 = inlined_call_operand.vmem [shape: f32[1,128], index: 2, kind: input, shape index: {}]
  %s3 = inlined_call_operand.hbm [shape: f32[128,128], index: 3, kind: input, shape index: {}]
  %s4 = inlined_call_operand.vmem [shape: f32[1,128], index: 4, kind: input, shape index: {}]
  %s5 = inlined_call_operand.vmem [shape: f32[16,4], index: 5, kind: output, shape index: {}]
  %s6 = sld [smem:[#allocation0]]
  $region38: #{_forward.1} parent=0
    _
  %s8 = ssub.s32 1, %s6
  %s9 = scalar_select 0, %s8, %s6
  $region1: #{_forward.1} parent=0
    #allocation2 [shape = 'u8[65536]{0}', space=vmem, size = 0x10000, scoped, tag = 'input window, operand 1, single buffered']
    #allocation3 [shape = 's32[1]{0}', space=sflag, size = 0x4, scoped, tag = 'scoped memory for _forward.1']
    #allocation4 [shape = 'u8[65536]{0}', space=vmem, size = 0x10000, scoped, tag = 'input window, operand 3, single buffered']
    #allocation5 [shape = 's32[1]{0}', space=sflag, size = 0x4, scoped, tag = 'scoped memory for _forward.1']
    %10 = vsyncpa [#allocation3], 0
    %11 = vsyncpa [#allocation5], 0
    // Predicated region
    $region2: #{_forward.1} parent=1 // pred_check
      _
    $region3: #{_forward.1} parent=1 // pred_check_branch
      %13 = sbr.rel (0) target = $region5
    $region4: #{_forward.1} parent=1 // pred_region
      _
    $region5: #{_forward.1} parent=1 // pred_fallthru
      _
    // Predicated region
    $region6: #{_forward.1} parent=1 // pred_check
      _
    $region7: #{_forward.1} parent=1 // pred_check_branch
      %15 = sbr.rel (0) target = $region9
    $region8: #{_forward.1} parent=1 // pred_region
      %17 = vsyncadd [#allocation3], 0
      %s18 = sshll.u32 %s1, 4
      %s19 = int_to_ptr.hbm [resolvable:$true] %s18
      %s20 = sshll.u32 [#allocation2], 4
      %s21 = int_to_ptr.vmem [resolvable:$true] %s20
      %26 = dma.hbm_to_vmem [thread:$0]  %s19, 2048, %s21, [#allocation3], 128, 128, 8
    $region9: #{_forward.1} parent=1 // pred_fallthru
      _
    // Predicated region
    $region10: #{_forward.1} parent=1 // pred_check
      _
    $region11: #{_forward.1} parent=1 // pred_check_branch
      %28 = sbr.rel (0) target = $region13
    $region12: #{_forward.1} parent=1 // pred_region
      _
    $region13: #{_forward.1} parent=1 // pred_fallthru
      _
    // Predicated region
    $region14: #{_forward.1} parent=1 // pred_check
      _
    $region15: #{_forward.1} parent=1 // pred_check_branch
      %30 = sbr.rel (0) target = $region17
    $region16: #{_forward.1} parent=1 // pred_region
      %32 = vsyncadd [#allocation5], 0
      %s33 = sshll.u32 %s3, 4
      %s34 = int_to_ptr.hbm [resolvable:$true] %s33
      %s35 = sshll.u32 [#allocation4], 4
      %s36 = int_to_ptr.vmem [resolvable:$true] %s35
      %41 = dma.hbm_to_vmem [thread:$0]  %s34, 2048, %s36, [#allocation5], 128, 128, 8
    $region17: #{_forward.1} parent=1 // pred_fallthru
      _
    // Predicated region
    $region18: #{_forward.1} parent=1 // pred_check
      _
    $region19: #{_forward.1} parent=1 // pred_check_branch
      %43 = sbr.rel (0) target = $region21
    $region20: #{_forward.1} parent=1 // pred_region
      _
    $region21: #{_forward.1} parent=1 // pred_fallthru
      _
    // Predicated region
    $region22: #{_forward.1} parent=1 // pred_check
      _
    $region23: #{_forward.1} parent=1 // pred_check_branch
      %45 = sbr.rel (0) target = $region25
    $region24: #{_forward.1} parent=1 // pred_region
      %47 = dma.done [#allocation3], 2048
    $region25: #{_forward.1} parent=1 // pred_fallthru
      _
    // Predicated region
    $region26: #{_forward.1} parent=1 // pred_check
      _
    $region27: #{_forward.1} parent=1 // pred_check_branch
      %49 = sbr.rel (0) target = $region29
    $region28: #{_forward.1} parent=1 // pred_region
      %51 = dma.done [#allocation5], 2048
    $region29: #{_forward.1} parent=1 // pred_fallthru
      _
    %v52 = vld [vmem:[%s0] sm:$0xff]
    %v53 = vld [vmem:[%s0 + $0x8] sm:$0xff]
    %v54 = vld [vmem:[#allocation2] sm:$0xff]
    %v55 = vld [vmem:[#allocation2 + $0x8] sm:$0xff]
    %v56 = vld [vmem:[#allocation2 + $0x10] sm:$0xff]
    %v57 = vld [vmem:[#allocation2 + $0x18] sm:$0xff]
    %v58 = vld [vmem:[#allocation2 + $0x20] sm:$0xff]
    %v59 = vld [vmem:[#allocation2 + $0x28] sm:$0xff]
    %v60 = vld [vmem:[#allocation2 + $0x30] sm:$0xff]
    %v61 = vld [vmem:[#allocation2 + $0x38] sm:$0xff]
    %v62 = vld [vmem:[#allocation2 + $0x40] sm:$0xff]
    %v63 = vld [vmem:[#allocation2 + $0x48] sm:$0xff]
    %v64 = vld [vmem:[#allocation2 + $0x50] sm:$0xff]
    %v65 = vld [vmem:[#allocation2 + $0x58] sm:$0xff]
    %v66 = vld [vmem:[#allocation2 + $0x60] sm:$0xff]
    %v67 = vld [vmem:[#allocation2 + $0x68] sm:$0xff]
    %v68 = vld [vmem:[#allocation2 + $0x70] sm:$0xff]
    %v69 = vld [vmem:[#allocation2 + $0x78] sm:$0xff]
    %v70 = vld [vmem:[%s2] sm:$0x1]
    %v72 = vperm.slane %v70, 0
    %74 = vmatpush.msra.mxu0 %v69
    %75 = vmatpush.msra.mxu0 %v68
    %76 = vmatpush.msra.mxu0 %v67
    %77 = vmatpush.msra.mxu0 %v66
    %78 = vmatpush.msra.mxu0 %v65
    %79 = vmatpush.msra.mxu0 %v64
    %80 = vmatpush.msra.mxu0 %v63
    %81 = vmatpush.msra.mxu0 %v62
    %82 = vmatpush.msra.mxu0 %v61
    %83 = vmatpush.msra.mxu0 %v60
    %84 = vmatpush.msra.mxu0 %v59
    %85 = vmatpush.msra.mxu0 %v58
    %86 = vmatpush.msra.mxu0 %v57
    %87 = vmatpush.msra.mxu0 %v56
    %88 = vmatpush.msra.mxu0 %v55
    %89 = vmatpush.msra.mxu0 %v54
    %90 = vmatmul.f32.gmra.mxu0 %v52
    %v91 = vpop.f32.mrf.mxu0
    %v92 = vadd.f32 %v72, %v91
    %93 = vmatmul.f32.gmra.mxu0 %v53
    %v94 = vpop.f32.mrf.mxu0
    %v95 = vadd.f32 %v72, %v94
    %96 = vdwg.mxu0
    %v97 = vmax.f32 %v92, 0.0
    %v98 = vmax.f32 %v95, 0.0
    %v99 = vld [vmem:[#allocation4] sm:$0xff]
    %v100 = vld [vmem:[#allocation4 + $0x8] sm:$0xff]
    %v101 = vld [vmem:[#allocation4 + $0x10] sm:$0xff]
    %v102 = vld [vmem:[#allocation4 + $0x18] sm:$0xff]
    %v103 = vld [vmem:[#allocation4 + $0x20] sm:$0xff]
    %v104 = vld [vmem:[#allocation4 + $0x28] sm:$0xff]
    %v105 = vld [vmem:[#allocation4 + $0x30] sm:$0xff]
    %v106 = vld [vmem:[#allocation4 + $0x38] sm:$0xff]
    %v107 = vld [vmem:[#allocation4 + $0x40] sm:$0xff]
    %v108 = vld [vmem:[#allocation4 + $0x48] sm:$0xff]
    %v109 = vld [vmem:[#allocation4 + $0x50] sm:$0xff]
    %v110 = vld [vmem:[#allocation4 + $0x58] sm:$0xff]
    %v111 = vld [vmem:[#allocation4 + $0x60] sm:$0xff]
    %v112 = vld [vmem:[#allocation4 + $0x68] sm:$0xff]
    %v113 = vld [vmem:[#allocation4 + $0x70] sm:$0xff]
    %v114 = vld [vmem:[#allocation4 + $0x78] sm:$0xff]
    %v115 = vld [vmem:[%s4] sm:$0x1]
    %v117 = vperm.slane %v115, 0
    %119 = vmatpush.msra.mxu0 %v114
    %120 = vmatpush.msra.mxu0 %v113
    %121 = vmatpush.msra.mxu0 %v112
    %122 = vmatpush.msra.mxu0 %v111
    %123 = vmatpush.msra.mxu0 %v110
    %124 = vmatpush.msra.mxu0 %v109
    %125 = vmatpush.msra.mxu0 %v108
    %126 = vmatpush.msra.mxu0 %v107
    %127 = vmatpush.msra.mxu0 %v106
    %128 = vmatpush.msra.mxu0 %v105
    %129 = vmatpush.msra.mxu0 %v104
    %130 = vmatpush.msra.mxu0 %v103
    %131 = vmatpush.msra.mxu0 %v102
    %132 = vmatpush.msra.mxu0 %v101
    %133 = vmatpush.msra.mxu0 %v100
    %134 = vmatpush.msra.mxu0 %v99
    %135 = vmatmul.f32.gmra.mxu0 %v97
    %v136 = vpop.f32.mrf.mxu0
    %v137 = vadd.f32 %v117, %v136
    %138 = vmatmul.f32.gmra.mxu0 %v98
    %v139 = vpop.f32.mrf.mxu0
    %v140 = vadd.f32 %v117, %v139
    %141 = vdwg.mxu0
    %v142 = vmax.f32 %v137, 0.0
    %v143 = vmax.f32 %v140, 0.0
    %vm144 = vcmask 31744
    %145 = vst.msk [vmem:[%s5] sm:$0xff] %vm144, %v142
    %146 = vst.msk [vmem:[%s5 + $0x8] sm:$0xff] %vm144, %v143
    // Predicated region
    $region30: #{_forward.1} parent=1 // pred_check
      _
    $region31: #{_forward.1} parent=1 // pred_check_branch
      %148 = sbr.rel (0) target = $region33
    $region32: #{_forward.1} parent=1 // pred_region
      _
    $region33: #{_forward.1} parent=1 // pred_fallthru
      _
    // Predicated region
    $region34: #{_forward.1} parent=1 // pred_check
      _
    $region35: #{_forward.1} parent=1 // pred_check_branch
      %150 = sbr.rel (0) target = $region37
    $region36: #{_forward.1} parent=1 // pred_region
      _
    $region37: #{_forward.1} parent=1 // pred_fallthru
      _
    %151 = vsyncpa [#allocation3], 1
    %152 = vsyncpa [#allocation5], 1

</llo_original>
